<compile_context>
chip_gen: v6e
topology: v6e:2x2x1
jax: 0.10.0
libtpu: 0.0.40
codegen_flags: <defaults>
</compile_context>

<pallas_src>
import functools

import numpy as np
import jax
import jax.numpy as jnp
from jax.experimental import pallas as pl
from jax.experimental.pallas import tpu as pltpu

SUBLANE = 8
LANE = 128


def _round_up(x, m):
    return ((x + m - 1) // m) * m


def gcn_block_kernel(a_ref, h_ref, inv_deg_ref, w_ref, b_ref, o_ref, acc_ref,
                     *, mode, f_out_p):
    k = pl.program_id(1)

    @pl.when(k == 0)
    def _init():
        acc_ref[...] = jnp.zeros_like(acc_ref)

    # copy_src + sum over this K-slab of source nodes (bf16 MXU, f32 accumulate).
    acc_ref[...] += jnp.dot(a_ref[...], h_ref[...],
                            preferred_element_type=jnp.float32)

    @pl.when(k == pl.num_programs(1) - 1)
    def _finish():
        # mailbox['m'].mean(dim=1): divide the message sum by the in-degree.
        agg = acc_ref[...] * inv_deg_ref[...]
        # NodeUpdate nn.Linear (bf16 MXU inputs, f32 accumulation) + bias.
        z = jnp.dot(agg.astype(w_ref.dtype), w_ref[...],
                    preferred_element_type=jnp.float32) + b_ref[...]
        if mode == "concat":
            # torch.cat((h, activation(h)), dim=1): two lane-aligned stores,
            # no (tile_m, 2*f_out_p) temporary.
            o_ref[:, :f_out_p] = z.astype(o_ref.dtype)
            o_ref[:, f_out_p:] = jnp.maximum(z, 0.0).astype(o_ref.dtype)
        elif mode == "relu":
            o_ref[...] = jnp.maximum(z, 0.0).astype(o_ref.dtype)
        else:
            o_ref[...] = z.astype(o_ref.dtype)


def gcn_block(a, h_p, col_map, w, b, *, mode, out_dtype,
              tile_m_max=128, tile_k_max=512):
    """One fused NodeFlow block: mean-aggregate + linear + activation/concat.

    a:       (n_dst, n_src) 0/1 block adjacency (true, unpadded shape).
    h_p:     (src_rows_p, f_in_p) padded source activations; rows [0:n_src] are real,
             real feature columns sit at positions `col_map` (other columns / rows are
             zeroed out of the math by the zero-padded A / W).
    col_map: (f_in,) int positions of the real input features inside h_p's columns.
    w, b:    Linear params, w stored as [in_feats, out_feats].
    Returns  (out_p, new_col_map): padded output activations and the column map of the
             real output features within them.
    """
    n_dst, n_src = a.shape
    src_rows, f_in_p = h_p.shape
    f_in, f_out = w.shape
    assert src_rows >= n_src and len(col_map) == f_in and f_in_p % LANE == 0

    # --- tile sizes (resolve to 128 / 512 at realistic NodeFlow block sizes) ---
    tile_m = min(tile_m_max, _round_up(n_dst, SUBLANE))
    tile_k = min(tile_k_max, _round_up(src_rows, LANE))
    n_dst_p = _round_up(n_dst, tile_m)
    k_p = _round_up(src_rows, tile_k)
    f_out_p = _round_up(f_out, LANE)
    out_w_p = 2 * f_out_p if mode == "concat" else f_out_p

    # --- pad operands (all padding is exact zeros, inert in every matmul) ---
    a_p = jnp.pad(a, ((0, n_dst_p - n_dst), (0, k_p - n_src))).astype(jnp.bfloat16)
    hp = jnp.pad(h_p, ((0, k_p - src_rows), (0, 0))).astype(jnp.bfloat16)
    deg = jnp.maximum(a.sum(axis=1, keepdims=True), 1.0)          # mean divisor
    inv_deg = jnp.pad(1.0 / deg, ((0, n_dst_p - n_dst), (0, 0)),
                      constant_values=1.0).astype(jnp.float32)
    w_p = jnp.zeros((f_in_p, f_out_p), jnp.bfloat16)
    w_p = w_p.at[np.asarray(col_map), :f_out].set(w.astype(jnp.bfloat16))
    b_p = jnp.pad(b.astype(jnp.float32).reshape(1, f_out), ((0, 0), (0, f_out_p - f_out)))

    grid = (n_dst_p // tile_m, k_p // tile_k)

    out_p = pl.pallas_call(
        functools.partial(gcn_block_kernel, mode=mode, f_out_p=f_out_p),
        out_shape=jax.ShapeDtypeStruct((n_dst_p, out_w_p), out_dtype),
        grid_spec=pltpu.PrefetchScalarGridSpec(
            num_scalar_prefetch=0,
            grid=grid,
            in_specs=[
                pl.BlockSpec((tile_m, tile_k), lambda i, k: (i, k)),   # A tile
                pl.BlockSpec((tile_k, f_in_p), lambda i, k: (k, 0)),   # H K-slab
                pl.BlockSpec((tile_m, 1), lambda i, k: (i, 0)),        # 1/deg tile
                pl.BlockSpec((f_in_p, f_out_p), lambda i, k: (0, 0)),  # W (resident)
                pl.BlockSpec((1, f_out_p), lambda i, k: (0, 0)),       # b (resident)
            ],
            out_specs=pl.BlockSpec((tile_m, out_w_p), lambda i, k: (i, 0)),
            scratch_shapes=[pltpu.VMEM((tile_m, f_in_p), jnp.float32)],
        ),
        compiler_params=pltpu.CompilerParams(
            dimension_semantics=("parallel", "arbitrary")),
    )(a_p, hp, inv_deg, w_p, b_p)

    if mode == "concat":
        new_col_map = np.concatenate([np.arange(f_out), f_out_p + np.arange(f_out)])
    else:
        new_col_map = np.arange(f_out)
    return out_p, new_col_map


def gcn_sampling_forward(features, adjs, weights, biases, n_layers,
                         dropout=0.0, rng=None):
    """Equivalent of GCNSampling.forward over a NodeFlow with n_layers+1 blocks."""
    in_feats = features.shape[1]
    f0_p = _round_up(in_feats, LANE)
    h_p = jnp.pad(features, ((0, 0), (0, f0_p - in_feats))).astype(jnp.bfloat16)
    col_map = np.arange(in_feats)

    for i in range(n_layers + 1):
        # nn.Dropout on the block input (inverted dropout; no-op when p == 0).
        # TODO(synk): dropout mask generation stays in plain JAX; it could be fused
        # into the kernel with pltpu.prng_* if it ever shows up in the profile.
        if dropout > 0.0 and rng is not None:
            rng, sub = jax.random.split(rng)
            keep = jax.random.bernoulli(sub, 1.0 - dropout, h_p.shape)
            h_p = jnp.where(keep, h_p / (1.0 - dropout), 0.0).astype(h_p.dtype)

        if i < n_layers:
            mode = "concat" if i == n_layers - 1 else "relu"
            out_dtype = jnp.bfloat16          # bf16 intermediates: half the HBM traffic
        else:
            mode = "none"                     # final NodeUpdate(2*n_hidden, n_classes)
            out_dtype = jnp.float32
        h_p, col_map = gcn_block(adjs[i], h_p, col_map, weights[i], biases[i],
                                 mode=mode, out_dtype=out_dtype)

    n_dst_final = adjs[-1].shape[0]
    n_classes = weights[-1].shape[1]
    return h_p[:n_dst_final, :n_classes]


def _reference_forward(features, adjs, weights, biases, n_layers):
    # Pure-JAX reference mirroring the kernel's dtype policy (bf16 MXU inputs,
    # f32 accumulation, bf16 intermediate activations).
    h = features
    for i in range(n_layers + 1):
        inv_deg = 1.0 / jnp.maximum(adjs[i].sum(axis=1, keepdims=True), 1.0)
        agg = jnp.dot(adjs[i].astype(jnp.bfloat16), h.astype(jnp.bfloat16),
                      preferred_element_type=jnp.float32) * inv_deg
        z = jnp.dot(agg.astype(jnp.bfloat16), weights[i].astype(jnp.bfloat16),
                    preferred_element_type=jnp.float32) + biases[i]
        if i < n_layers:
            if i == n_layers - 1:
                h = jnp.concatenate([z, jax.nn.relu(z)], axis=1)
            else:
                h = jax.nn.relu(z)
            h = h.astype(jnp.bfloat16)
        else:
            h = z
    return h


if __name__ == "__main__":
    in_feats, n_hidden, n_classes, n_layers = 16, 32, 4, 2

    # NodeFlow node-layer sizes (n_layers + 2 node layers -> n_layers + 1 blocks).
    layer_sizes = [24, 16, 16, 8]

    key = jax.random.PRNGKey(0)
    keys = jax.random.split(key, 16)

    features = jax.random.normal(keys[0], (layer_sizes[0], in_feats), dtype=jnp.float32)

    # Block adjacencies A_i: [N_{i+1}, N_i], 0/1 edges (unweighted NodeFlow blocks).
    adjs = []
    for i in range(n_layers + 1):
        a = (jax.random.uniform(keys[1 + i], (layer_sizes[i + 1], layer_sizes[i]))
             < 0.4).astype(jnp.float32)
        adjs.append(a)

    # Linear parameters, stored as [in_feats, out_feats] (torch Linear weight, transposed).
    layer_dims = ([(in_feats, n_hidden)]
                  + [(n_hidden, n_hidden)] * (n_layers - 1)
                  + [(2 * n_hidden, n_classes)])
    weights, biases = [], []
    for j, (fi, fo) in enumerate(layer_dims):
        weights.append(0.1 * jax.random.normal(keys[8 + j], (fi, fo), dtype=jnp.float32))
        biases.append(0.05 * jax.random.normal(keys[12 + j], (fo,), dtype=jnp.float32))

    out = gcn_sampling_forward(features, adjs, weights, biases, n_layers, dropout=0.0)
    out = jax.block_until_ready(out)

    ref = _reference_forward(features, adjs, weights, biases, n_layers)
    assert out.shape == (layer_sizes[-1], n_classes), out.shape
    max_err = float(jnp.max(jnp.abs(out - ref)))
    assert jnp.allclose(out, ref, atol=2e-3, rtol=2e-2), f"mismatch vs reference: {max_err}"

    print("KERNEL_OK")
</pallas_src>

<mosaic_0001>
module attributes {stable_mosaic.version = 11 : i64} {
  func.func @gcn_block_kernel(%arg0: i32, %arg1: i32, %arg2: memref<16x128xbf16, #tpu.memory_space<vmem>>, %arg3: memref<128x128xbf16, #tpu.memory_space<vmem>>, %arg4: memref<16x1xf32, #tpu.memory_space<vmem>>, %arg5: memref<128x128xbf16, #tpu.memory_space<vmem>>, %arg6: memref<1x128xf32, #tpu.memory_space<vmem>>, %arg7: memref<16x128xbf16, #tpu.memory_space<vmem>>, %arg8: memref<16x128xf32, #tpu.memory_space<vmem>>) attributes {dimension_semantics = [#tpu.dimension_semantics<parallel>, #tpu.dimension_semantics<arbitrary>], iteration_bounds = array<i64: 1, 1>, scalar_prefetch = 0 : i64, scratch_operands = 1 : i64, tpu.core_type = #tpu.core_type<tc>, window_params = [{transform_indices = @transform_0, window_bounds = array<i64: 16, 128>}, {transform_indices = @transform_1, window_bounds = array<i64: 128, 128>}, {transform_indices = @transform_2, window_bounds = array<i64: 16, 1>}, {pipeline_mode = #tpu.pipeline_mode<synchronous>, transform_indices = @transform_3, window_bounds = array<i64: 128, 128>}, {pipeline_mode = #tpu.pipeline_mode<synchronous>, transform_indices = @transform_4, window_bounds = array<i64: 1, 128>}, {transform_indices = @transform_5, window_bounds = array<i64: 16, 128>}]} {
    %c0_i32 = arith.constant 0 : i32
    %0 = arith.cmpi eq, %arg1, %c0_i32 : i32
    %1 = arith.extui %0 : i1 to i32
    %c0_i32_0 = arith.constant 0 : i32
    %2 = arith.cmpi ne, %1, %c0_i32_0 : i32
    scf.if %2 {
      %cst_10 = arith.constant 0.000000e+00 : f32
      %12 = vector.broadcast %cst_10 : f32 to vector<16x128xf32>
      %c0_11 = arith.constant 0 : index
      %c0_12 = arith.constant 0 : index
      %13 = vector.load %arg8[%c0_11, %c0_12] : memref<16x128xf32, #tpu.memory_space<vmem>>, vector<16x128xf32>
      tpu.vector_store %arg8[%c0_11, %c0_12], %12 {strides = array<i32>} : memref<16x128xf32, #tpu.memory_space<vmem>>, vector<16x128xf32>,
    } else {
    }
    %c0 = arith.constant 0 : index
    %c0_1 = arith.constant 0 : index
    %3 = vector.load %arg8[%c0, %c0_1] : memref<16x128xf32, #tpu.memory_space<vmem>>, vector<16x128xf32>
    %c0_2 = arith.constant 0 : index
    %c0_3 = arith.constant 0 : index
    %4 = vector.load %arg2[%c0_2, %c0_3] : memref<16x128xbf16, #tpu.memory_space<vmem>>, vector<16x128xbf16>
    %c0_4 = arith.constant 0 : index
    %c0_5 = arith.constant 0 : index
    %5 = vector.load %arg3[%c0_4, %c0_5] : memref<128x128xbf16, #tpu.memory_space<vmem>>, vector<128x128xbf16>
    %cst = arith.constant dense<0.000000e+00> : vector<16x128xf32>
    %6 = tpu.matmul %4, %5, %cst {dimension_numbers = #tpu.dot_dimension_numbers<[1], [0], [0], [1], [0, 0, 1, 1], [], []>} : vector<16x128xbf16>, vector<128x128xbf16>, vector<16x128xf32> -> vector<16x128xf32>
    %7 = arith.addf %3, %6 : vector<16x128xf32>
    %c0_6 = arith.constant 0 : index
    %c0_7 = arith.constant 0 : index
    %8 = vector.load %arg8[%c0_6, %c0_7] : memref<16x128xf32, #tpu.memory_space<vmem>>, vector<16x128xf32>
    tpu.vector_store %arg8[%c0_6, %c0_7], %7 {strides = array<i32>} : memref<16x128xf32, #tpu.memory_space<vmem>>, vector<16x128xf32>,
    %c0_i32_8 = arith.constant 0 : i32
    %9 = arith.cmpi eq, %arg1, %c0_i32_8 : i32
    %10 = arith.extui %9 : i1 to i32
    %c0_i32_9 = arith.constant 0 : i32
    %11 = arith.cmpi ne, %10, %c0_i32_9 : i32
    scf.if %11 {
      %c0_10 = arith.constant 0 : index
      %c0_11 = arith.constant 0 : index
      %12 = vector.load %arg8[%c0_10, %c0_11] : memref<16x128xf32, #tpu.memory_space<vmem>>, vector<16x128xf32>
      %c0_12 = arith.constant 0 : index
      %c0_13 = arith.constant 0 : index
      %13 = vector.load %arg4[%c0_12, %c0_13] : memref<16x1xf32, #tpu.memory_space<vmem>>, vector<16x1xf32>
      %14 = vector.broadcast %13 : vector<16x1xf32> to vector<16x128xf32>
      %15 = arith.mulf %12, %14 : vector<16x128xf32>
      %16 = arith.truncf %15 : vector<16x128xf32> to vector<16x128xbf16>
      %c0_14 = arith.constant 0 : index
      %c0_15 = arith.constant 0 : index
      %17 = vector.load %arg5[%c0_14, %c0_15] : memref<128x128xbf16, #tpu.memory_space<vmem>>, vector<128x128xbf16>
      %cst_16 = arith.constant dense<0.000000e+00> : vector<16x128xf32>
      %18 = tpu.matmul %16, %17, %cst_16 {dimension_numbers = #tpu.dot_dimension_numbers<[1], [0], [0], [1], [0, 0, 1, 1], [], []>} : vector<16x128xbf16>, vector<128x128xbf16>, vector<16x128xf32> -> vector<16x128xf32>
      %c0_17 = arith.constant 0 : index
      %c0_18 = arith.constant 0 : index
      %19 = vector.load %arg6[%c0_17, %c0_18] : memref<1x128xf32, #tpu.memory_space<vmem>>, vector<1x128xf32>
      %20 = vector.broadcast %19 : vector<1x128xf32> to vector<16x128xf32>
      %21 = arith.addf %18, %20 : vector<16x128xf32>
      %cst_19 = arith.constant 0.000000e+00 : f32
      %22 = vector.broadcast %cst_19 : f32 to vector<16x128xf32>
      %23 = arith.maximumf %21, %22 : vector<16x128xf32>
      %24 = arith.truncf %23 : vector<16x128xf32> to vector<16x128xbf16>
      %c0_20 = arith.constant 0 : index
      %c0_21 = arith.constant 0 : index
      %25 = vector.load %arg7[%c0_20, %c0_21] : memref<16x128xbf16, #tpu.memory_space<vmem>>, vector<16x128xbf16>
      tpu.vector_store %arg7[%c0_20, %c0_21], %24 {strides = array<i32>} : memref<16x128xbf16, #tpu.memory_space<vmem>>, vector<16x128xbf16>,
    } else {
    }
    return
  }
  func.func @transform_0(%arg0: i32, %arg1: i32) -> (i32, i32) {
    %c0_i32 = arith.constant 0 : i32
    return %arg0, %arg1 : i32, i32
  }
  func.func @transform_1(%arg0: i32, %arg1: i32) -> (i32, i32) {
    %c0_i32 = arith.constant 0 : i32
    %c0_i32_0 = arith.constant 0 : i32
    return %arg1, %c0_i32 : i32, i32
  }
  func.func @transform_2(%arg0: i32, %arg1: i32) -> (i32, i32) {
    %c0_i32 = arith.constant 0 : i32
    %c0_i32_0 = arith.constant 0 : i32
    return %arg0, %c0_i32 : i32, i32
  }
  func.func @transform_3(%arg0: i32, %arg1: i32) -> (i32, i32) {
    %c0_i32 = arith.constant 0 : i32
    %c0_i32_0 = arith.constant 0 : i32
    %c0_i32_1 = arith.constant 0 : i32
    return %c0_i32, %c0_i32_0 : i32, i32
  }
  func.func @transform_4(%arg0: i32, %arg1: i32) -> (i32, i32) {
    %c0_i32 = arith.constant 0 : i32
    %c0_i32_0 = arith.constant 0 : i32
    %c0_i32_1 = arith.constant 0 : i32
    return %c0_i32, %c0_i32_0 : i32, i32
  }
  func.func @transform_5(%arg0: i32, %arg1: i32) -> (i32, i32) {
    %c0_i32 = arith.constant 0 : i32
    %c0_i32_0 = arith.constant 0 : i32
    return %arg0, %c0_i32 : i32, i32
  }
}

</mosaic_0001>

<llo_original>
// kernel: tpu_custom_call.1
$region0: #{tpu_custom_call.1}
  #allocation0 [shape = 'u32[]', space=smem, size = 0x4, offset = 0x4, fixed_abs, tag = 'smem constant byte address 0x4 - core index']
  #allocation1 [shape = 'u32[144,128]{1,0:T(1,128)}', space=vmem, size = 0x12000, scoped, tag = 'internal scratch']
  #allocation2 [shape = 'f32[16,128]{1,0:T(8,128)}', space=vmem, size = 0x2000, scoped, tag = 'scratch operand']
  %s0 = inlined_call_operand.vmem [shape: bf16[16,128], index: 0, kind: input, shape index: {}]
  %s1 = inlined_call_operand.hbm [shape: bf16[128,128], index: 1, kind: input, shape index: {}]
  %s2 = inlined_call_operand.vmem [shape: f32[16,1], index: 2, kind: input, shape index: {}]
  %s3 = inlined_call_operand.hbm [shape: bf16[128,128], index: 3, kind: input, shape index: {}]
  %s4 = inlined_call_operand.vmem [shape: f32[1,128], index: 4, kind: input, shape index: {}]
  %s5 = inlined_call_operand.hbm [shape: bf16[16,128], index: 5, kind: output, shape index: {}]
  %s6 = sld [smem:[#allocation0]]
  $region46: #{tpu_custom_call.1} parent=0
    _
  %s8 = ssub.s32 1, %s6
  %s9 = scalar_select 0, %s8, %s6
  $region1: #{tpu_custom_call.1} parent=0
    #allocation3 [shape = 'u8[32768]{0}', space=vmem, size = 0x8000, scoped, tag = 'input window, operand 1, single buffered']
    #allocation4 [shape = 's32[1]{0}', space=sflag, size = 0x4, scoped, tag = 'scoped memory for tpu_custom_call.1']
    #allocation5 [shape = 's32[1]{0}', space=sflag, size = 0x4, scoped, tag = 'scoped memory for tpu_custom_call.1']
    #allocation6 [shape = 'u8[32768]{0}', space=vmem, size = 0x8000, scoped, tag = 'input window, operand 3, single buffered']
    #allocation7 [shape = 's32[1]{0}', space=sflag, size = 0x4, scoped, tag = 'scoped memory for tpu_custom_call.1']
    #allocation8 [shape = 'u8[4096]{0}', space=vmem, size = 0x1000, scoped, tag = 'output window, operand 0, single buffered']
    %10 = vsyncpa [#allocation4], 0
    %11 = vsyncpa [#allocation7], 0
    %12 = vsyncpa [#allocation5], 0
    // Predicated region
    $region2: #{tpu_custom_call.1} parent=1 // pred_check
      _
    $region3: #{tpu_custom_call.1} parent=1 // pred_check_branch
      %14 = sbr.rel (0) target = $region5
    $region4: #{tpu_custom_call.1} parent=1 // pred_region
      _
    $region5: #{tpu_custom_call.1} parent=1 // pred_fallthru
      _
    // Predicated region
    $region6: #{tpu_custom_call.1} parent=1 // pred_check
      _
    $region7: #{tpu_custom_call.1} parent=1 // pred_check_branch
      %16 = sbr.rel (0) target = $region9
    $region8: #{tpu_custom_call.1} parent=1 // pred_region
      %s18 = ssub.s32 1024, 1024
      %19 = vsyncadd [#allocation4], %s18
      %s20 = sshll.u32 [#allocation3], 4
      %s21 = int_to_ptr.vmem [resolvable:$true] %s20
      %26 = dma.hbm_to_vmem [thread:$0]  %s1, 1024, %s21, [#allocation4], 64, 64, 4
    $region9: #{tpu_custom_call.1} parent=1 // pred_fallthru
      _
    // Predicated region
    $region10: #{tpu_custom_call.1} parent=1 // pred_check
      _
    $region11: #{tpu_custom_call.1} parent=1 // pred_check_branch
      %28 = sbr.rel (0) target = $region13
    $region12: #{tpu_custom_call.1} parent=1 // pred_region
      _
    $region13: #{tpu_custom_call.1} parent=1 // pred_fallthru
      _
    // Predicated region
    $region14: #{tpu_custom_call.1} parent=1 // pred_check
      _
    $region15: #{tpu_custom_call.1} parent=1 // pred_check_branch
      %30 = sbr.rel (0) target = $region17
    $region16: #{tpu_custom_call.1} parent=1 // pred_region
      %s32 = ssub.s32 1024, 1024
      %33 = vsyncadd [#allocation7], %s32
      %s34 = sshll.u32 [#allocation6], 4
      %s35 = int_to_ptr.vmem [resolvable:$true] %s34
      %40 = dma.hbm_to_vmem [thread:$0]  %s3, 1024, %s35, [#allocation7], 64, 64, 4
    $region17: #{tpu_custom_call.1} parent=1 // pred_fallthru
      _
    // Predicated region
    $region18: #{tpu_custom_call.1} parent=1 // pred_check
      _
    $region19: #{tpu_custom_call.1} parent=1 // pred_check_branch
      %42 = sbr.rel (0) target = $region21
    $region20: #{tpu_custom_call.1} parent=1 // pred_region
      _
    $region21: #{tpu_custom_call.1} parent=1 // pred_fallthru
      _
    // Predicated region
    $region22: #{tpu_custom_call.1} parent=1 // pred_check
      _
    $region23: #{tpu_custom_call.1} parent=1 // pred_check_branch
      %44 = sbr.rel (0) target = $region25
    $region24: #{tpu_custom_call.1} parent=1 // pred_region
      %45 = dma.done [#allocation4], 1024
    $region25: #{tpu_custom_call.1} parent=1 // pred_fallthru
      _
    // Predicated region
    $region26: #{tpu_custom_call.1} parent=1 // pred_check
      _
    $region27: #{tpu_custom_call.1} parent=1 // pred_check_branch
      %47 = sbr.rel (0) target = $region29
    $region28: #{tpu_custom_call.1} parent=1 // pred_region
      %48 = dma.done [#allocation7], 1024
    $region29: #{tpu_custom_call.1} parent=1 // pred_fallthru
      _
    %p50 = scmp.eq.s32.totalorder 0, 0
    // Predicated region
    $region30: #{tpu_custom_call.1} parent=1 // pred_check
      %p51 = pneg %p50
    $region31: #{tpu_custom_call.1} parent=1 // pred_check_branch
      %53 = sbr.rel (%p51) target = $region33
    $region32: #{tpu_custom_call.1} parent=1 // pred_region
      %54 = vst [vmem:[#allocation2] sm:$0xff] 0.0
      %55 = vst [vmem:[#allocation2 + $0x8] sm:$0xff] 0.0
    $region33: #{tpu_custom_call.1} parent=1 // pred_fallthru
      _
    %v56 = vld [vmem:[#allocation2] sm:$0xff]
    %v57 = vld [vmem:[#allocation2 + $0x8] sm:$0xff]
    %v58 = vld [vmem:[%s0] sm:$0xf]
    %v59 = vld [vmem:[%s0 + $0x4] sm:$0xf]
    %v60 = vld [vmem:[#allocation3] sm:$0xf]
    %v61 = vld [vmem:[#allocation3 + $0x4] sm:$0xf]
    %v62 = vld [vmem:[#allocation3 + $0x8] sm:$0xf]
    %v63 = vld [vmem:[#allocation3 + $0xc] sm:$0xf]
    %v64 = vld [vmem:[#allocation3 + $0x10] sm:$0xf]
    %v65 = vld [vmem:[#allocation3 + $0x14] sm:$0xf]
    %v66 = vld [vmem:[#allocation3 + $0x18] sm:$0xf]
    %v67 = vld [vmem:[#allocation3 + $0x1c] sm:$0xf]
    %v68 = vld [vmem:[#allocation3 + $0x20] sm:$0xf]
    %v69 = vld [vmem:[#allocation3 + $0x24] sm:$0xf]
    %v70 = vld [vmem:[#allocation3 + $0x28] sm:$0xf]
    %v71 = vld [vmem:[#allocation3 + $0x2c] sm:$0xf]
    %v72 = vld [vmem:[#allocation3 + $0x30] sm:$0xf]
    %v73 = vld [vmem:[#allocation3 + $0x34] sm:$0xf]
    %v74 = vld [vmem:[#allocation3 + $0x38] sm:$0xf]
    %v75 = vld [vmem:[#allocation3 + $0x3c] sm:$0xf]
    %v78 = vunpack.c.l.b16 %v58
    %v79 = vunpack.c.l.b16 %v59
    %v80 = vpack.c.b16 %v79, %v78
    %v98 = vunpack.c.l.b16 %v60
    %v99 = vunpack.c.l.b16 %v61
    %v100 = vunpack.c.l.b16 %v62
    %v101 = vunpack.c.l.b16 %v63
    %v102 = vunpack.c.l.b16 %v64
    %v103 = vunpack.c.l.b16 %v65
    %v104 = vunpack.c.l.b16 %v66
    %v105 = vunpack.c.l.b16 %v67
    %v106 = vunpack.c.l.b16 %v68
    %v107 = vunpack.c.l.b16 %v69
    %v108 = vunpack.c.l.b16 %v70
    %v109 = vunpack.c.l.b16 %v71
    %v110 = vunpack.c.l.b16 %v72
    %v111 = vunpack.c.l.b16 %v73
    %v112 = vunpack.c.l.b16 %v74
    %v113 = vunpack.c.l.b16 %v75
    %v114 = vpack.c.b16 %v99, %v98
    %v115 = vpack.c.b16 %v101, %v100
    %v116 = vpack.c.b16 %v103, %v102
    %v117 = vpack.c.b16 %v105, %v104
    %v118 = vpack.c.b16 %v107, %v106
    %v119 = vpack.c.b16 %v109, %v108
    %v120 = vpack.c.b16 %v111, %v110
    %v121 = vpack.c.b16 %v113, %v112
    %130 = vmatprep.subr.bf16.mxu0 0
    %131 = vmatpush1.bf16.msra.mxu0 %v121
    %132 = vmatprep.subr.bf16.mxu0 0
    %133 = vmatpush1.bf16.msra.mxu0 %v120
    %134 = vmatprep.subr.bf16.mxu0 0
    %135 = vmatpush1.bf16.msra.mxu0 %v119
    %136 = vmatprep.subr.bf16.mxu0 0
    %137 = vmatpush1.bf16.msra.mxu0 %v118
    %138 = vmatprep.subr.bf16.mxu0 0
    %139 = vmatpush1.bf16.msra.mxu0 %v117
    %140 = vmatprep.subr.bf16.mxu0 0
    %141 = vmatpush1.bf16.msra.mxu0 %v116
    %142 = vmatprep.subr.bf16.mxu0 0
    %143 = vmatpush1.bf16.msra.mxu0 %v115
    %144 = vmatprep.subr.bf16.mxu0 0
    %145 = vmatpush1.bf16.msra.mxu0 %v114
    %146 = vmatprep.subr.bf16.mxu0 0
    %147 = vmatpush2.bf16.msra.mxu0 0
    %148 = vmatprep.subr.bf16.mxu0 0
    %149 = vmatpush2.bf16.msra.mxu0 0
    %150 = vmatprep.subr.bf16.mxu0 0
    %151 = vmatpush2.bf16.msra.mxu0 0
    %152 = vmatprep.subr.bf16.mxu0 0
    %153 = vmatpush2.bf16.msra.mxu0 0
    %154 = vmatprep.subr.bf16.mxu0 0
    %155 = vmatpush2.bf16.msra.mxu0 0
    %156 = vmatprep.subr.bf16.mxu0 0
    %157 = vmatpush2.bf16.msra.mxu0 0
    %158 = vmatprep.subr.bf16.mxu0 0
    %159 = vmatpush2.bf16.msra.mxu0 0
    %160 = vmatprep.subr.bf16.mxu0 0
    %161 = vmatpush2.bf16.msra.mxu0 0
    %162 = vmatprep.mubr.bf16.mxu0 0
    %163 = vmatmul.mubr.bf16.gmra.mxu0 %v80
    %v164 = vpop.f32.mrf.mxu0
    %v165 = vadd.f32 0.0, %v164
    %v166 = vpop.f32.mrf.mxu0
    %v167 = vpop.f32.mrf.mxu0
    %v168 = vadd.f32 0.0, %v167
    %v169 = vpop.f32.mrf.mxu0
    %170 = vdwg.mxu0
    %v171 = vadd.f32 %v56, %v165
    %v172 = vadd.f32 %v57, %v168
    %173 = vst [vmem:[#allocation2] sm:$0xff] %v171
    %174 = vst [vmem:[#allocation2 + $0x8] sm:$0xff] %v172
    // Predicated region
    $region34: #{tpu_custom_call.1} parent=1 // pred_check
      %p175 = pneg %p50
    $region35: #{tpu_custom_call.1} parent=1 // pred_check_branch
      %177 = sbr.rel (%p175) target = $region37
    $region36: #{tpu_custom_call.1} parent=1 // pred_region
      %v178 = vld [vmem:[#allocation2] sm:$0xff]
      %v179 = vld [vmem:[#allocation2 + $0x8] sm:$0xff]
      %v180 = vld [vmem:[%s2] sm:$0xff]
      %v181 = vld [vmem:[%s2 + $0x8] sm:$0xff]
      %183 = vset.pattern.permute.xlu0 0
      %184 = vperm.xlu0 %183, %v180
      %v185 = vpop.permute.xlu0 %184
      %188 = vset.pattern.permute.xlu0 0
      %189 = vperm.xlu0 %188, %v181
      %v190 = vpop.permute.xlu0 %189
      %v192 = vmul.f32 %v178, %v185
      %v193 = vmul.f32 %v179, %v190
      %v194 = vpack.c.bf16 %v193, %v192
      %v195 = vld [vmem:[#allocation6] sm:$0xf]
      %v196 = vld [vmem:[#allocation6 + $0x4] sm:$0xf]
      %v197 = vld [vmem:[#allocation6 + $0x8] sm:$0xf]
      %v198 = vld [vmem:[#allocation6 + $0xc] sm:$0xf]
      %v199 = vld [vmem:[#allocation6 + $0x10] sm:$0xf]
      %v200 = vld [vmem:[#allocation6 + $0x14] sm:$0xf]
      %v201 = vld [vmem:[#allocation6 + $0x18] sm:$0xf]
      %v202 = vld [vmem:[#allocation6 + $0x1c] sm:$0xf]
      %v203 = vld [vmem:[#allocation6 + $0x20] sm:$0xf]
      %v204 = vld [vmem:[#allocation6 + $0x24] sm:$0xf]
      %v205 = vld [vmem:[#allocation6 + $0x28] sm:$0xf]
      %v206 = vld [vmem:[#allocation6 + $0x2c] sm:$0xf]
      %v207 = vld [vmem:[#allocation6 + $0x30] sm:$0xf]
      %v208 = vld [vmem:[#allocation6 + $0x34] sm:$0xf]
      %v209 = vld [vmem:[#allocation6 + $0x38] sm:$0xf]
      %v210 = vld [vmem:[#allocation6 + $0x3c] sm:$0xf]
      %v211 = vld [vmem:[%s4] sm:$0x1]
      %v213 = vlaneseq
      %v214 = vshrl.u32 %v213, 7
      %v215 = vsub.s32 0, %v214
      %v216 = vrot.slane %v211, %v215
      %v234 = vunpack.c.l.b16 %v195
      %v235 = vunpack.c.l.b16 %v196
      %v236 = vunpack.c.l.b16 %v197
      %v237 = vunpack.c.l.b16 %v198
      %v238 = vunpack.c.l.b16 %v199
      %v239 = vunpack.c.l.b16 %v200
      %v240 = vunpack.c.l.b16 %v201
      %v241 = vunpack.c.l.b16 %v202
      %v242 = vunpack.c.l.b16 %v203
      %v243 = vunpack.c.l.b16 %v204
      %v244 = vunpack.c.l.b16 %v205
      %v245 = vunpack.c.l.b16 %v206
      %v246 = vunpack.c.l.b16 %v207
      %v247 = vunpack.c.l.b16 %v208
      %v248 = vunpack.c.l.b16 %v209
      %v249 = vunpack.c.l.b16 %v210
      %v250 = vpack.c.b16 %v235, %v234
      %v251 = vpack.c.b16 %v237, %v236
      %v252 = vpack.c.b16 %v239, %v238
      %v253 = vpack.c.b16 %v241, %v240
      %v254 = vpack.c.b16 %v243, %v242
      %v255 = vpack.c.b16 %v245, %v244
      %v256 = vpack.c.b16 %v247, %v246
      %v257 = vpack.c.b16 %v249, %v248
      %266 = vmatprep.subr.bf16.mxu0 0
      %267 = vmatpush1.bf16.msra.mxu0 %v257
      %268 = vmatprep.subr.bf16.mxu0 0
      %269 = vmatpush1.bf16.msra.mxu0 %v256
      %270 = vmatprep.subr.bf16.mxu0 0
      %271 = vmatpush1.bf16.msra.mxu0 %v255
      %272 = vmatprep.subr.bf16.mxu0 0
      %273 = vmatpush1.bf16.msra.mxu0 %v254
      %274 = vmatprep.subr.bf16.mxu0 0
      %275 = vmatpush1.bf16.msra.mxu0 %v253
      %276 = vmatprep.subr.bf16.mxu0 0
      %277 = vmatpush1.bf16.msra.mxu0 %v252
      %278 = vmatprep.subr.bf16.mxu0 0
      %279 = vmatpush1.bf16.msra.mxu0 %v251
      %280 = vmatprep.subr.bf16.mxu0 0
      %281 = vmatpush1.bf16.msra.mxu0 %v250
      %282 = vmatprep.subr.bf16.mxu0 0
      %283 = vmatpush2.bf16.msra.mxu0 0
      %284 = vmatprep.subr.bf16.mxu0 0
      %285 = vmatpush2.bf16.msra.mxu0 0
      %286 = vmatprep.subr.bf16.mxu0 0
      %287 = vmatpush2.bf16.msra.mxu0 0
      %288 = vmatprep.subr.bf16.mxu0 0
      %289 = vmatpush2.bf16.msra.mxu0 0
      %290 = vmatprep.subr.bf16.mxu0 0
      %291 = vmatpush2.bf16.msra.mxu0 0
      %292 = vmatprep.subr.bf16.mxu0 0
      %293 = vmatpush2.bf16.msra.mxu0 0
      %294 = vmatprep.subr.bf16.mxu0 0
      %295 = vmatpush2.bf16.msra.mxu0 0
      %296 = vmatprep.subr.bf16.mxu0 0
      %297 = vmatpush2.bf16.msra.mxu0 0
      %298 = vmatprep.mubr.bf16.mxu0 0
      %299 = vmatmul.mubr.bf16.gmra.mxu0 %v194
      %v300 = vpop.f32.mrf.mxu0
      %v301 = vadd.f32 %v216, %v300
      %v302 = vpop.f32.mrf.mxu0
      %v303 = vpop.f32.mrf.mxu0
      %v304 = vadd.f32 %v216, %v303
      %v305 = vpop.f32.mrf.mxu0
      %306 = vdwg.mxu0
      %v307 = vmax.f32 %v301, 0.0
      %v308 = vmax.f32 %v304, 0.0
      %v309 = vpack.c.bf16 %v308, %v307
      %v311 = vunpack.c.l.b16 %v309
      %v312 = vunpack.c.h.b16 %v309
      %v313 = vpack.c.b16 %v311, %v311
      %v314 = vpack.c.b16 %v312, %v312
      %317 = vst [vmem:[#allocation8] sm:$0xf] %v313
      %318 = vst [vmem:[#allocation8 + $0x4] sm:$0xf] %v314
    $region37: #{tpu_custom_call.1} parent=1 // pred_fallthru
      _
    // Predicated region
    $region38: #{tpu_custom_call.1} parent=1 // pred_check
      _
    $region39: #{tpu_custom_call.1} parent=1 // pred_check_branch
      %320 = sbr.rel (0) target = $region41
    $region40: #{tpu_custom_call.1} parent=1 // pred_region
      %s322 = ssub.s32 128, 128
      %323 = vsyncadd [#allocation5], %s322
      %s324 = sshll.u32 [#allocation8], 4
      %s325 = int_to_ptr.vmem [resolvable:$true] %s324
      %330 = dma.vmem_to_hbm [thread:$0]  %s325, 128, %s5, [#allocation5], 64, 64, 4
    $region41: #{tpu_custom_call.1} parent=1 // pred_fallthru
      _
    // Predicated region
    $region42: #{tpu_custom_call.1} parent=1 // pred_check
      _
    $region43: #{tpu_custom_call.1} parent=1 // pred_check_branch
      %332 = sbr.rel (0) target = $region45
    $region44: #{tpu_custom_call.1} parent=1 // pred_region
      %333 = dma.done [#allocation5], 128
    $region45: #{tpu_custom_call.1} parent=1 // pred_fallthru
      _
    %334 = vsyncpa [#allocation4], 1
    %335 = vsyncpa [#allocation7], 1
    %336 = vsyncpa [#allocation5], 1

</llo_original>
